<compile_context>
chip_gen: v7x
topology: tpu7x:2x2x1
jax: 0.10.0
libtpu: 0.0.40
codegen_flags: <defaults>
</compile_context>

<pallas_src>
import functools

import jax
import jax.numpy as jnp
from jax import lax
from jax.experimental import pallas as pl
from jax.experimental.pallas import tpu as pltpu

LN_EPS = 1e-5  # torch.nn.LayerNorm default


def _round_up(a: int, b: int) -> int:
    return (a + b - 1) // b * b


def _tpu_vmem_info():
    """Best-effort (vmem_capacity_bytes, is_v7_like) with device_kind fallback."""
    kind = ""
    try:
        kind = jax.devices()[0].device_kind.lower()
    except Exception:
        pass
    is_v7 = "7" in kind
    cap = None
    try:
        info_fn = getattr(pltpu, "get_tpu_info", None)
        if info_fn is not None:
            cap = int(info_fn().vmem_capacity_bytes)
    except Exception:
        cap = None
    if cap is None or cap <= 0:
        if ("v2" in kind) or ("v3" in kind):
            cap = 16 * 1024 * 1024
        elif is_v7:
            cap = 64 * 1024 * 1024          # v7x: 64 MiB per TensorCore
        else:
            cap = 128 * 1024 * 1024         # v4 / v5e / v5p / v6e
    return cap, is_v7


def _pick_k_tile(c_pad: int, mm_itemsize: int, vmem_cap: int) -> int:
    """Keep the full (C, C) weight resident (single VMEM copy) if it fits; else
    stream K in tiles, preferring 256-multiples (fills the 256-deep MXU)."""
    if c_pad * c_pad * mm_itemsize <= vmem_cap // 2:
        return c_pad
    best = None
    for kt in range(256, min(c_pad, 1024) + 1, 256):
        if c_pad % kt == 0:
            best = kt
    if best is None:
        for kt in range(128, min(c_pad, 1024) + 1, 128):
            if c_pad % kt == 0:
                best = kt
    return best if best is not None else 128


def _vmem_budget_bytes(tm, k_tile, c_pad, num_k, x_itemsize, mm_itemsize, nbuf_x):
    w_copies = 1 if num_k == 1 else 2          # resident single copy vs streamed
    return (nbuf_x * tm * k_tile * x_itemsize  # x stream buffers
            + w_copies * k_tile * c_pad * mm_itemsize
            + 2 * tm * c_pad * x_itemsize      # output block (double-buffered)
            + tm * c_pad * 4                   # f32 accumulator scratch
            + 8 * c_pad * 4)                   # bias / gamma / beta


def _pick_row_tile(M, sub, target, k_tile, c_pad, num_k,
                   x_itemsize, mm_itemsize, nbuf_x, vmem_cap):
    tm = max(sub, min(_round_up(target, sub), _round_up(M, sub)))
    limit = int(vmem_cap * 0.85)
    while (tm > sub and
           _vmem_budget_bytes(tm, k_tile, c_pad, num_k,
                              x_itemsize, mm_itemsize, nbuf_x) > limit):
        new_tm = max(sub, _round_up(tm // 2, sub))
        if new_tm >= tm:
            break
        tm = new_tm
    # Dual-TC (v7x) / megacore guard: don't leave one core idle when M fits a
    # single row tile; the extra grid step is negligible on single-TC parts.
    if -(-M // tm) == 1 and M > sub:
        half = max(sub, _round_up(-(-M // 2), sub))
        if half < tm:
            tm = half
    return tm


def _linear_resblock_kernel(x_ref, w_ref, b_ref, g_ref, beta_ref, o_ref, acc_ref,
                            *, num_k, k_tile, c_true, mm_dtype):
    """grid = (row tiles, K tiles); K (reduction) is the inner 'arbitrary' axis.

    acc_ref: (tm, C_pad) f32 VMEM accumulator (Linear bias folded into its init).
    The output block index is (i, 0) for every K step, so o_ref stays resident in
    VMEM across the K loop: in the streamed-K path each x tile is staged directly
    into its column slice of o_ref (no identity-stash scratch), and the epilogue
    is a single full-width lane-dense read-modify-write.
    """
    k = pl.program_id(1)

    @pl.when(k == 0)
    def _init():
        # Fold the bias into the accumulator init (saves one VPU pass per tile).
        acc_ref[...] = jnp.broadcast_to(b_ref[...], acc_ref.shape)

    x_tile = x_ref[...]                                        # (tm, k_tile)

    # Matmul on the MXU in mm_dtype (bf16 by default) with f32 accumulation.
    acc_ref[...] += jnp.dot(x_tile.astype(mm_dtype), w_ref[...],
                            preferred_element_type=jnp.float32)

    if num_k > 1:
        # Stage the identity slice straight into the resident output block.
        # Static, lane-aligned column slices; only one branch runs per step.
        for kk in range(num_k):
            @pl.when(k == kk)
            def _stage(kk=kk):
                o_ref[:, kk * k_tile:(kk + 1) * k_tile] = x_tile.astype(o_ref.dtype)

    @pl.when(k == num_k - 1)
    def _epilogue():
        y = acc_ref[...]                                       # (tm, C_pad) f32
        inv_c = 1.0 / c_true
        # Padded feature columns of y are exactly 0 (zero-padded x, w and bias),
        # so plain sums give the true-C statistics: var = E[y^2] - mean^2 in f32
        # (no iota/where mask pass needed).
        mean = jnp.sum(y, axis=-1, keepdims=True) * inv_c
        ex2 = jnp.sum(y * y, axis=-1, keepdims=True) * inv_c
        var = jnp.maximum(ex2 - mean * mean, 0.0)
        y_norm = (y - mean) * lax.rsqrt(var + LN_EPS)
        res = jnp.maximum(y_norm * g_ref[...] + beta_ref[...], 0.0)

        # NOTE: rows past M in a partial last row tile hold unspecified data and
        # may produce NaN/inf here; their writeback is masked by Pallas so valid
        # rows are unaffected.  Do not "fix" this by reading that garbage.
        if num_k == 1:
            o_ref[...] = (x_tile.astype(jnp.float32) + res).astype(o_ref.dtype)
        else:
            o_ref[...] = (o_ref[...].astype(jnp.float32) + res).astype(o_ref.dtype)


@functools.partial(
    jax.jit,
    static_argnames=("row_tile", "k_tile", "matmul_dtype", "stream_buffers"))
def linear_resblock(x, w, b, gamma, beta, *, row_tile=None, k_tile=None,
                    matmul_dtype=jnp.bfloat16, stream_buffers=2):
    """out = x + relu(layernorm(x @ w + b)).

    x: (..., C).  w: (C, C) stored as (in, out) (transpose of the torch layout).
    b / gamma / beta: (C,).

    matmul_dtype controls the MXU operand dtype (default bf16 for perf; weight
    shipped as bf16, x cast per-tile in the kernel).  Accumulation, LayerNorm,
    ReLU and the residual add stay in f32.  Pass jnp.float32 explicitly when the
    PyTorch-f32 numerics matter.
    """
    orig_shape = x.shape
    C = orig_shape[-1]
    x2 = x.reshape(-1, C)
    M = x2.shape[0]

    # Lane-dense feature axis: pad C up to a multiple of 128 only when needed.
    # Zero pads keep LN/ReLU/residual exact; padded output columns are dropped.
    C_pad = _round_up(C, 128)
    if C_pad != C:
        x2 = jnp.pad(x2, ((0, 0), (0, C_pad - C)))
        w = jnp.pad(w, ((0, C_pad - C), (0, C_pad - C)))
        b = jnp.pad(b, (0, C_pad - C))
        gamma = jnp.pad(gamma, (0, C_pad - C))
        beta = jnp.pad(beta, (0, C_pad - C))

    w = w.astype(matmul_dtype)            # halve weight HBM/VMEM traffic (bf16)
    b2 = b.astype(jnp.float32).reshape(1, C_pad)
    g2 = gamma.astype(jnp.float32).reshape(1, C_pad)
    beta2 = beta.astype(jnp.float32).reshape(1, C_pad)

    x_itemsize = jnp.dtype(x.dtype).itemsize
    mm_itemsize = jnp.dtype(matmul_dtype).itemsize

    vmem_cap, is_v7 = _tpu_vmem_info()

    if k_tile is None:
        k_tile = _pick_k_tile(C_pad, mm_itemsize, vmem_cap)
    assert k_tile % 128 == 0 and C_pad % k_tile == 0, (
        "k_tile must be a 128-multiple divisor of the padded feature dim")
    num_k = C_pad // k_tile

    nbuf_x = max(2, int(stream_buffers))

    # Dtype-aware row tile (sublane pack: 8 for f32, 16 for bf16/f16 I/O).
    # No row padding: cdiv grid + Pallas boundary masking handle the tail tile.
    sub = 8 if x_itemsize >= 4 else 16
    if row_tile is None:
        # Resident-weight path: 256 amortizes per-step overhead.  Streamed-K
        # path refetches the weight once per row tile, so push tm towards the
        # machine balance point (~512 on v7x, ~640 on v6e/v5e), VMEM permitting.
        target = 256 if num_k == 1 else (512 if is_v7 else 640)
    else:
        target = int(row_tile)
    tm = _pick_row_tile(M, sub, target, k_tile, C_pad, num_k,
                        x_itemsize, mm_itemsize, nbuf_x, vmem_cap)
    grid_m = -(-M // tm)

    # Scoped-VMEM limit sized from the actual tile budget.
    needed = _vmem_budget_bytes(tm, k_tile, C_pad, num_k,
                                x_itemsize, mm_itemsize, nbuf_x)
    vmem_limit = int(min(int(vmem_cap * 0.9),
                         max(int(needed * 1.5), 32 * 1024 * 1024)))

    # Optional deeper pipelining applies to the x stream only (never the output,
    # whose block index is (i, 0) and is revisited across the K axis).
    if stream_buffers != 2:
        x_spec = pl.BlockSpec((tm, k_tile), lambda i, k: (i, k),
                              pipeline_mode=pl.Buffered(int(stream_buffers)))
    else:
        x_spec = pl.BlockSpec((tm, k_tile), lambda i, k: (i, k))

    if num_k == 1:
        # Whole weight resident in VMEM as a SINGLE copy (no double buffering,
        # no per-grid-step refetch).
        w_spec = pl.BlockSpec(memory_space=pltpu.MemorySpace.VMEM)
    else:
        w_spec = pl.BlockSpec((k_tile, C_pad), lambda i, k: (k, 0))

    kernel = functools.partial(
        _linear_resblock_kernel,
        num_k=num_k, k_tile=k_tile, c_true=C, mm_dtype=matmul_dtype)

    out = pl.pallas_call(
        kernel,
        out_shape=jax.ShapeDtypeStruct((M, C_pad), x.dtype),
        grid_spec=pltpu.PrefetchScalarGridSpec(
            num_scalar_prefetch=0,
            grid=(grid_m, num_k),
            in_specs=[
                x_spec,                                            # x row tile
                w_spec,                                            # weight
                pl.BlockSpec((1, C_pad), lambda i, k: (0, 0)),     # bias
                pl.BlockSpec((1, C_pad), lambda i, k: (0, 0)),     # LN gamma
                pl.BlockSpec((1, C_pad), lambda i, k: (0, 0)),     # LN beta
            ],
            out_specs=pl.BlockSpec((tm, C_pad), lambda i, k: (i, 0)),
            scratch_shapes=[pltpu.VMEM((tm, C_pad), jnp.float32)],
        ),
        compiler_params=pltpu.CompilerParams(
            dimension_semantics=("parallel", "arbitrary"),
            vmem_limit_bytes=vmem_limit),
    )(x2, w, b2, g2, beta2)

    if C_pad != C:
        out = out[:, :C]
    return out.reshape(orig_shape)


def init_params(key, in_ch):
    """nn.Linear default init; weight stored transposed as (in, out)."""
    kw, kb = jax.random.split(key)
    bound = 1.0 / (in_ch ** 0.5)
    w = jax.random.uniform(kw, (in_ch, in_ch), jnp.float32, -bound, bound)
    b = jax.random.uniform(kb, (in_ch,), jnp.float32, -bound, bound)
    gamma = jnp.ones((in_ch,), jnp.float32)
    beta = jnp.zeros((in_ch,), jnp.float32)
    return w, b, gamma, beta


def _reference(x, w, b, gamma, beta, *, matmul_dtype=jnp.float32):
    x32 = x.astype(jnp.float32)
    y = jnp.dot(x.astype(matmul_dtype), w.astype(matmul_dtype),
                preferred_element_type=jnp.float32) + b
    mean = jnp.mean(y, axis=-1, keepdims=True)
    var = jnp.mean((y - mean) ** 2, axis=-1, keepdims=True)
    yn = (y - mean) / jnp.sqrt(var + LN_EPS) * gamma + beta
    return x32 + jnp.maximum(yn, 0.0)


if __name__ == "__main__":
    key = jax.random.PRNGKey(0)
    kx1, kp1, kx2, kp2, kx3, kp3 = jax.random.split(key, 6)

    # 1) Module-implied shapes (batch=2, seq=8, in_ch=32): C < 128 exercises
    #    lane padding + padded-column-aware LN stats; M=16 exercises the
    #    dual-TC row-tile split and the resident (memory_space=VMEM) weight.
    in_ch = 32
    x1 = jax.random.normal(kx1, (2, 8, in_ch), jnp.float32)
    w1, b1, g1, bt1 = init_params(kp1, in_ch)
    out1 = jax.block_until_ready(linear_resblock(x1, w1, b1, g1, bt1))
    assert out1.shape == x1.shape
    ref1_bf16 = _reference(x1, w1, b1, g1, bt1, matmul_dtype=jnp.bfloat16)
    assert jnp.allclose(out1, ref1_bf16, atol=1e-4, rtol=1e-4), "mismatch (bf16 ref)"
    # Explicit full-precision knob vs the f32 (PyTorch-like) reference.
    out1_f32 = jax.block_until_ready(
        linear_resblock(x1, w1, b1, g1, bt1, matmul_dtype=jnp.float32))
    ref1_f32 = _reference(x1, w1, b1, g1, bt1, matmul_dtype=jnp.float32)
    assert jnp.allclose(out1_f32, ref1_f32, atol=1e-2, rtol=1e-2), "mismatch (f32 knob)"

    # 2) Streamed-K path (forced k_tile=128 -> num_k=2, identity staged into the
    #    resident output block) + uneven row tail (boundary-masked writeback).
    in_ch2 = 256
    x2 = jax.random.normal(kx2, (300, in_ch2), jnp.float32)
    w2, b2, g2, bt2 = init_params(kp2, in_ch2)
    out2 = jax.block_until_ready(linear_resblock(x2, w2, b2, g2, bt2, k_tile=128))
    ref2 = _reference(x2, w2, b2, g2, bt2, matmul_dtype=jnp.bfloat16)
    assert jnp.allclose(out2, ref2, atol=5e-4, rtol=5e-4), "mismatch (K-tiled path)"

    # 3) bf16 I/O path (16-row sublane packing).
    in_ch3 = 128
    x3 = jax.random.normal(kx3, (2, 128, in_ch3), jnp.float32).astype(jnp.bfloat16)
    w3, b3, g3, bt3 = init_params(kp3, in_ch3)
    out3 = jax.block_until_ready(linear_resblock(x3, w3, b3, g3, bt3))
    ref3 = _reference(x3, w3, b3, g3, bt3, matmul_dtype=jnp.bfloat16)
    assert jnp.allclose(out3.astype(jnp.float32), ref3, atol=3e-2, rtol=3e-2), \
        "mismatch (bf16 I/O path)"

    print("KERNEL_OK")
</pallas_src>

<mosaic_0001>
module attributes {stable_mosaic.version = 11 : i64} {
  func.func @_linear_resblock_kernel(%arg0: i32, %arg1: i32, %arg2: memref<8x128xf32, #tpu.memory_space<vmem>>, %arg3: memref<128x128xbf16, #tpu.memory_space<vmem>>, %arg4: memref<1x128xf32, #tpu.memory_space<vmem>>, %arg5: memref<1x128xf32, #tpu.memory_space<vmem>>, %arg6: memref<1x128xf32, #tpu.memory_space<vmem>>, %arg7: memref<8x128xf32, #tpu.memory_space<vmem>>, %arg8: memref<8x128xf32, #tpu.memory_space<vmem>>) attributes {dimension_semantics = [#tpu.dimension_semantics<parallel>, #tpu.dimension_semantics<arbitrary>], iteration_bounds = array<i64: 2, 1>, scalar_prefetch = 0 : i64, scratch_operands = 1 : i64, tpu.core_type = #tpu.core_type<tc>, window_params = [{transform_indices = @transform_0, window_bounds = array<i64: 8, 128>}, {pipeline_mode = #tpu.pipeline_mode<synchronous>, transform_indices = @transform_1, window_bounds = array<i64: 128, 128>}, {pipeline_mode = #tpu.pipeline_mode<synchronous>, transform_indices = @transform_2, window_bounds = array<i64: 1, 128>}, {pipeline_mode = #tpu.pipeline_mode<synchronous>, transform_indices = @transform_3, window_bounds = array<i64: 1, 128>}, {pipeline_mode = #tpu.pipeline_mode<synchronous>, transform_indices = @transform_4, window_bounds = array<i64: 1, 128>}, {transform_indices = @transform_5, window_bounds = array<i64: 8, 128>}]} {
    %c0_i32 = arith.constant 0 : i32
    %0 = arith.cmpi eq, %arg1, %c0_i32 : i32
    %1 = arith.extui %0 : i1 to i32
    %c0_i32_0 = arith.constant 0 : i32
    %2 = arith.cmpi ne, %1, %c0_i32_0 : i32
    scf.if %2 {
      %c0_10 = arith.constant 0 : index
      %c0_11 = arith.constant 0 : index
      %13 = vector.load %arg4[%c0_10, %c0_11] : memref<1x128xf32, #tpu.memory_space<vmem>>, vector<1x128xf32>
      %14 = vector.shape_cast %13 : vector<1x128xf32> to vector<1x128xf32>
      %15 = vector.broadcast %14 : vector<1x128xf32> to vector<8x128xf32>
      %c0_12 = arith.constant 0 : index
      %c0_13 = arith.constant 0 : index
      %16 = vector.load %arg8[%c0_12, %c0_13] : memref<8x128xf32, #tpu.memory_space<vmem>>, vector<8x128xf32>
      tpu.vector_store %arg8[%c0_12, %c0_13], %15 {strides = array<i32>} : memref<8x128xf32, #tpu.memory_space<vmem>>, vector<8x128xf32>,
    } else {
    }
    %c0 = arith.constant 0 : index
    %c0_1 = arith.constant 0 : index
    %3 = vector.load %arg2[%c0, %c0_1] : memref<8x128xf32, #tpu.memory_space<vmem>>, vector<8x128xf32>
    %c0_2 = arith.constant 0 : index
    %c0_3 = arith.constant 0 : index
    %4 = vector.load %arg8[%c0_2, %c0_3] : memref<8x128xf32, #tpu.memory_space<vmem>>, vector<8x128xf32>
    %5 = arith.truncf %3 : vector<8x128xf32> to vector<8x128xbf16>
    %c0_4 = arith.constant 0 : index
    %c0_5 = arith.constant 0 : index
    %6 = vector.load %arg3[%c0_4, %c0_5] : memref<128x128xbf16, #tpu.memory_space<vmem>>, vector<128x128xbf16>
    %cst = arith.constant dense<0.000000e+00> : vector<8x128xf32>
    %7 = tpu.matmul %5, %6, %cst {dimension_numbers = #tpu.dot_dimension_numbers<[1], [0], [0], [1], [0, 0, 1, 1], [], []>} : vector<8x128xbf16>, vector<128x128xbf16>, vector<8x128xf32> -> vector<8x128xf32>
    %8 = arith.addf %4, %7 : vector<8x128xf32>
    %c0_6 = arith.constant 0 : index
    %c0_7 = arith.constant 0 : index
    %9 = vector.load %arg8[%c0_6, %c0_7] : memref<8x128xf32, #tpu.memory_space<vmem>>, vector<8x128xf32>
    tpu.vector_store %arg8[%c0_6, %c0_7], %8 {strides = array<i32>} : memref<8x128xf32, #tpu.memory_space<vmem>>, vector<8x128xf32>,
    %c0_i32_8 = arith.constant 0 : i32
    %10 = arith.cmpi eq, %arg1, %c0_i32_8 : i32
    %11 = arith.extui %10 : i1 to i32
    %c0_i32_9 = arith.constant 0 : i32
    %12 = arith.cmpi ne, %11, %c0_i32_9 : i32
    scf.if %12 {
      %c0_10 = arith.constant 0 : index
      %c0_11 = arith.constant 0 : index
      %13 = vector.load %arg8[%c0_10, %c0_11] : memref<8x128xf32, #tpu.memory_space<vmem>>, vector<8x128xf32>
      %cst_12 = arith.constant dense<0.000000e+00> : vector<8xf32>
      %14 = vector.multi_reduction <add>, %13, %cst_12 [1] : vector<8x128xf32> to vector<8xf32>
      %15 = vector.shape_cast %14 : vector<8xf32> to vector<8x1xf32>
      %cst_13 = arith.constant 3.125000e-02 : f32
      %16 = vector.broadcast %cst_13 : f32 to vector<8x1xf32>
      %17 = arith.mulf %15, %16 : vector<8x1xf32>
      %18 = arith.mulf %13, %13 : vector<8x128xf32>
      %cst_14 = arith.constant dense<0.000000e+00> : vector<8xf32>
      %19 = vector.multi_reduction <add>, %18, %cst_14 [1] : vector<8x128xf32> to vector<8xf32>
      %20 = vector.shape_cast %19 : vector<8xf32> to vector<8x1xf32>
      %cst_15 = arith.constant 3.125000e-02 : f32
      %21 = vector.broadcast %cst_15 : f32 to vector<8x1xf32>
      %22 = arith.mulf %20, %21 : vector<8x1xf32>
      %23 = arith.mulf %17, %17 : vector<8x1xf32>
      %24 = arith.subf %22, %23 : vector<8x1xf32>
      %cst_16 = arith.constant 0.000000e+00 : f32
      %25 = vector.broadcast %cst_16 : f32 to vector<8x1xf32>
      %26 = arith.maximumf %24, %25 : vector<8x1xf32>
      %27 = vector.broadcast %17 : vector<8x1xf32> to vector<8x128xf32>
      %28 = arith.subf %13, %27 : vector<8x128xf32>
      %cst_17 = arith.constant 9.99999974E-6 : f32
      %29 = vector.broadcast %cst_17 : f32 to vector<8x1xf32>
      %30 = arith.addf %26, %29 : vector<8x1xf32>
      %31 = math.rsqrt %30 : vector<8x1xf32>
      %32 = vector.broadcast %31 : vector<8x1xf32> to vector<8x128xf32>
      %33 = arith.mulf %28, %32 : vector<8x128xf32>
      %c0_18 = arith.constant 0 : index
      %c0_19 = arith.constant 0 : index
      %34 = vector.load %arg5[%c0_18, %c0_19] : memref<1x128xf32, #tpu.memory_space<vmem>>, vector<1x128xf32>
      %35 = vector.broadcast %34 : vector<1x128xf32> to vector<8x128xf32>
      %36 = arith.mulf %33, %35 : vector<8x128xf32>
      %c0_20 = arith.constant 0 : index
      %c0_21 = arith.constant 0 : index
      %37 = vector.load %arg6[%c0_20, %c0_21] : memref<1x128xf32, #tpu.memory_space<vmem>>, vector<1x128xf32>
      %38 = vector.broadcast %37 : vector<1x128xf32> to vector<8x128xf32>
      %39 = arith.addf %36, %38 : vector<8x128xf32>
      %cst_22 = arith.constant 0.000000e+00 : f32
      %40 = vector.broadcast %cst_22 : f32 to vector<8x128xf32>
      %41 = arith.maximumf %39, %40 : vector<8x128xf32>
      %42 = arith.addf %3, %41 : vector<8x128xf32>
      %c0_23 = arith.constant 0 : index
      %c0_24 = arith.constant 0 : index
      %43 = vector.load %arg7[%c0_23, %c0_24] : memref<8x128xf32, #tpu.memory_space<vmem>>, vector<8x128xf32>
      tpu.vector_store %arg7[%c0_23, %c0_24], %42 {strides = array<i32>} : memref<8x128xf32, #tpu.memory_space<vmem>>, vector<8x128xf32>,
    } else {
    }
    return
  }
  func.func @transform_0(%arg0: i32, %arg1: i32) -> (i32, i32) {
    %c0_i32 = arith.constant 0 : i32
    return %arg0, %arg1 : i32, i32
  }
  func.func @transform_1(%arg0: i32, %arg1: i32) -> (i32, i32) {
    %c0_i32 = arith.constant 0 : i32
    %c0_i32_0 = arith.constant 0 : i32
    %c0_i32_1 = arith.constant 0 : i32
    return %c0_i32, %c0_i32_0 : i32, i32
  }
  func.func @transform_2(%arg0: i32, %arg1: i32) -> (i32, i32) {
    %c0_i32 = arith.constant 0 : i32
    %c0_i32_0 = arith.constant 0 : i32
    %c0_i32_1 = arith.constant 0 : i32
    return %c0_i32, %c0_i32_0 : i32, i32
  }
  func.func @transform_3(%arg0: i32, %arg1: i32) -> (i32, i32) {
    %c0_i32 = arith.constant 0 : i32
    %c0_i32_0 = arith.constant 0 : i32
    %c0_i32_1 = arith.constant 0 : i32
    return %c0_i32, %c0_i32_0 : i32, i32
  }
  func.func @transform_4(%arg0: i32, %arg1: i32) -> (i32, i32) {
    %c0_i32 = arith.constant 0 : i32
    %c0_i32_0 = arith.constant 0 : i32
    %c0_i32_1 = arith.constant 0 : i32
    return %c0_i32, %c0_i32_0 : i32, i32
  }
  func.func @transform_5(%arg0: i32, %arg1: i32) -> (i32, i32) {
    %c0_i32 = arith.constant 0 : i32
    %c0_i32_0 = arith.constant 0 : i32
    return %arg0, %c0_i32 : i32, i32
  }
}

</mosaic_0001>

<llo_original>
// kernel: linear_resblock.1
$region0: #{linear_resblock.1}
  #allocation0 [shape = 'u32[]', space=smem, size = 0x4, offset = 0x4, fixed_abs, tag = 'smem constant byte address 0x4 - core index']
  #allocation1 [shape = 'u32[144,128]{1,0:T(1,128)}', space=vmem, size = 0x12000, scoped, tag = 'internal scratch']
  #allocation2 [shape = 'f32[8,128]{1,0:T(8,128)}', space=vmem, size = 0x1000, scoped, tag = 'scratch operand']
  %s0 = inlined_call_operand.vmem [shape: f32[16,128], index: 0, kind: input, shape index: {}]
  %s1 = inlined_call_operand.vmem [shape: bf16[128,128], index: 1, kind: input, shape index: {}]
  %s2 = inlined_call_operand.vmem [shape: f32[1,128], index: 2, kind: input, shape index: {}]
  %s3 = inlined_call_operand.vmem [shape: f32[1,128], index: 3, kind: input, shape index: {}]
  %s4 = inlined_call_operand.vmem [shape: f32[1,128], index: 4, kind: input, shape index: {}]
  %s5 = inlined_call_operand.vmem [shape: f32[16,128], index: 5, kind: output, shape index: {}]
  %s6 = sld [smem:[#allocation0]]
  $region61: #{linear_resblock.1} parent=0
    _
  %s8 = ssub.s32 1, %s6
  %s9 = scalar_select 0, %s8, %s6
  loop: start=0, step=1, limit=4
  $region2: #{linear_resblock.1} parent=0 // loop_pre_header
    _
  $region3: #{linear_resblock.1} parent=0 // loop_header
    %s11 = sphi 0, %s15
    %p12 = scmp.ge.s32.totalorder %s11, 4
    %s18 = sphi 0, %s30
    %s19 = sphi 0, %s26
    %s20 = sphi 0, %s18
    %s21 = sphi 0, %s19
    %s22 = sphi 0, %s20
    %s23 = sphi 0, %s21
    %s35 = sphi 0, %s37
    %s38 = sphi 0, %s35
    %s39 = sphi 0, %s38
    %s55 = sphi 0, %s39
    %s59 = sphi 0, %s59
    %s61 = sphi 0, %s59
    %s62 = sphi 0, %s61
    %s76 = sphi 0, %s62
    %s80 = sphi 0, %s80
    %s82 = sphi 0, %s80
    %s83 = sphi 0, %s82
    %s97 = sphi 0, %s83
    %s101 = sphi 0, %s101
    %s103 = sphi 0, %s101
    %s104 = sphi 0, %s103
    %s118 = sphi 0, %s104
    %s122 = sphi 0, %s122
    %s124 = sphi 0, %s122
    %s125 = sphi 0, %s124
    %s139 = sphi 0, %s125
    %s145 = sphi 0, %s147
    %s148 = sphi 0, %s145
    %s149 = sphi 0, %s148
    %s165 = sphi 0, %s149
  $region4: #{linear_resblock.1} parent=0 // loop_header_branch
    %14 = sbr.rel (%p12) target = $region8
  $region5: #{linear_resblock.1} parent=0 // loop_body
    %s16 = ssub.s32 %s11, 1
    %s17 = ssub.s32 %s11, 2
    %s24 = sadd.s32 1, %s19
    %p25 = scmp.ge.s32.totalorder %s24, 1
    %s26 = scalar_select %p25, 0, %s24
    %s27 = sadd.s32 1, %s18
    %s28 = scalar_select %p25, %s27, %s18
    %p29 = scmp.ge.s32.totalorder %s28, 2
    %s30 = scalar_select %p29, 0, %s28
    %s31 = ssub.s32 %s18, %s30
    %s32 = ssub.s32 %s19, %s26
    %s33 = sor.u32 %s31, %s32
    %p34 = scmp.eq.s32.totalorder %s33, 0
    %s36 = sadd.s32 %s35, 1
    %s37 = scalar_select %p34, %s35, %s36
    %p40 = pneg %p34
    %p41 = scmp.eq.s32.totalorder %s11, 1
    %p42 = por %p40, %p41
    %p43 = scmp.ne.s32.totalorder %s35, %s38
    %p44 = scmp.eq.s32.totalorder %s11, 0
    %p45 = por %p43, %p44
    %p46 = scmp.ne.s32.totalorder %s35, %s38
    %p47 = scmp.eq.s32.totalorder %s16, 1
    %p48 = por %p46, %p47
    %p49 = scmp.ne.s32.totalorder %s38, %s39
    %p50 = scmp.eq.s32.totalorder %s16, 0
    %p51 = por %p49, %p50
    %p52 = scmp.ne.s32.totalorder %s38, %s39
    %p53 = scmp.eq.s32.totalorder %s17, 1
    %p54 = por %p52, %p53
    %p56 = scmp.ne.s32.totalorder %s39, %s55
    %p57 = scmp.eq.s32.totalorder %s17, 0
    %p58 = por %p56, %p57
    %s60 = sadd.s32 %s59, 1
    %p63 = scmp.eq.s32.totalorder %s11, 1
    %p64 = scmp.ne.s32.totalorder %s59, %s61
    %p65 = scmp.eq.s32.totalorder %s11, 0
    %p66 = por %p64, %p65
    %p67 = scmp.ne.s32.totalorder %s59, %s61
    %p68 = scmp.eq.s32.totalorder %s16, 1
    %p69 = por %p67, %p68
    %p70 = scmp.ne.s32.totalorder %s61, %s62
    %p71 = scmp.eq.s32.totalorder %s16, 0
    %p72 = por %p70, %p71
    %p73 = scmp.ne.s32.totalorder %s61, %s62
    %p74 = scmp.eq.s32.totalorder %s17, 1
    %p75 = por %p73, %p74
    %p77 = scmp.ne.s32.totalorder %s62, %s76
    %p78 = scmp.eq.s32.totalorder %s17, 0
    %p79 = por %p77, %p78
    %s81 = sadd.s32 %s80, 1
    %p84 = scmp.eq.s32.totalorder %s11, 1
    %p85 = scmp.ne.s32.totalorder %s80, %s82
    %p86 = scmp.eq.s32.totalorder %s11, 0
    %p87 = por %p85, %p86
    %p88 = scmp.ne.s32.totalorder %s80, %s82
    %p89 = scmp.eq.s32.totalorder %s16, 1
    %p90 = por %p88, %p89
    %p91 = scmp.ne.s32.totalorder %s82, %s83
    %p92 = scmp.eq.s32.totalorder %s16, 0
    %p93 = por %p91, %p92
    %p94 = scmp.ne.s32.totalorder %s82, %s83
    %p95 = scmp.eq.s32.totalorder %s17, 1
    %p96 = por %p94, %p95
    %p98 = scmp.ne.s32.totalorder %s83, %s97
    %p99 = scmp.eq.s32.totalorder %s17, 0
    %p100 = por %p98, %p99
    %s102 = sadd.s32 %s101, 1
    %p105 = scmp.eq.s32.totalorder %s11, 1
    %p106 = scmp.ne.s32.totalorder %s101, %s103
    %p107 = scmp.eq.s32.totalorder %s11, 0
    %p108 = por %p106, %p107
    %p109 = scmp.ne.s32.totalorder %s101, %s103
    %p110 = scmp.eq.s32.totalorder %s16, 1
    %p111 = por %p109, %p110
    %p112 = scmp.ne.s32.totalorder %s103, %s104
    %p113 = scmp.eq.s32.totalorder %s16, 0
    %p114 = por %p112, %p113
    %p115 = scmp.ne.s32.totalorder %s103, %s104
    %p116 = scmp.eq.s32.totalorder %s17, 1
    %p117 = por %p115, %p116
    %p119 = scmp.ne.s32.totalorder %s104, %s118
    %p120 = scmp.eq.s32.totalorder %s17, 0
    %p121 = por %p119, %p120
    %s123 = sadd.s32 %s122, 1
    %p126 = scmp.eq.s32.totalorder %s11, 1
    %p127 = scmp.ne.s32.totalorder %s122, %s124
    %p128 = scmp.eq.s32.totalorder %s11, 0
    %p129 = por %p127, %p128
    %p130 = scmp.ne.s32.totalorder %s122, %s124
    %p131 = scmp.eq.s32.totalorder %s16, 1
    %p132 = por %p130, %p131
    %p133 = scmp.ne.s32.totalorder %s124, %s125
    %p134 = scmp.eq.s32.totalorder %s16, 0
    %p135 = por %p133, %p134
    %p136 = scmp.ne.s32.totalorder %s124, %s125
    %p137 = scmp.eq.s32.totalorder %s17, 1
    %p138 = por %p136, %p137
    %p140 = scmp.ne.s32.totalorder %s125, %s139
    %p141 = scmp.eq.s32.totalorder %s17, 0
    %p142 = por %p140, %p141
    %s143 = ssub.s32 %s18, %s30
    %p144 = scmp.eq.s32.totalorder %s143, 0
    %s146 = sadd.s32 %s145, 1
    %s147 = scalar_select %p144, %s145, %s146
    %p150 = pneg %p144
    %p151 = scmp.eq.s32.totalorder %s11, 1
    %p152 = por %p150, %p151
    %p153 = scmp.ne.s32.totalorder %s145, %s148
    %p154 = scmp.eq.s32.totalorder %s11, 0
    %p155 = por %p153, %p154
    %p156 = scmp.ne.s32.totalorder %s145, %s148
    %p157 = scmp.eq.s32.totalorder %s16, 1
    %p158 = por %p156, %p157
    %p159 = scmp.ne.s32.totalorder %s148, %s149
    %p160 = scmp.eq.s32.totalorder %s16, 0
    %p161 = por %p159, %p160
    %p162 = scmp.ne.s32.totalorder %s148, %s149
    %p163 = scmp.eq.s32.totalorder %s17, 1
    %p164 = por %p162, %p163
    %p166 = scmp.ne.s32.totalorder %s149, %s165
    %p167 = scmp.eq.s32.totalorder %s17, 0
    %p168 = por %p166, %p167
    %p169 = scmp.le.s32.totalorder 1, %s11
    %p170 = scmp.lt.s32.totalorder %s11, 3
    %p171 = pnand %p169, %p170
    %p172 = pneg %p171
    // Predicated region
    $region9: #{linear_resblock.1} parent=5 // pred_check
      _
    $region10: #{linear_resblock.1} parent=5 // pred_check_branch
      %174 = sbr.rel (%p171) target = $region12
    $region11: #{linear_resblock.1} parent=5 // pred_region
      %s175 = ssub.s32 %s11, 1
      // Predicated region
      $region13: #{linear_resblock.1} parent=11 // pred_check
        %p176 = pneg %p72
      $region14: #{linear_resblock.1} parent=11 // pred_check_branch
        %178 = sbr.rel (%p176) target = $region16
      $region15: #{linear_resblock.1} parent=11 // pred_region
        _
      $region16: #{linear_resblock.1} parent=11 // pred_fallthru
        _
      // Predicated region
      $region17: #{linear_resblock.1} parent=11 // pred_check
        %p179 = pneg %p93
      $region18: #{linear_resblock.1} parent=11 // pred_check_branch
        %181 = sbr.rel (%p179) target = $region20
      $region19: #{linear_resblock.1} parent=11 // pred_region
        _
      $region20: #{linear_resblock.1} parent=11 // pred_fallthru
        _
      // Predicated region
      $region21: #{linear_resblock.1} parent=11 // pred_check
        %p182 = pneg %p114
      $region22: #{linear_resblock.1} parent=11 // pred_check_branch
        %184 = sbr.rel (%p182) target = $region24
      $region23: #{linear_resblock.1} parent=11 // pred_region
        _
      $region24: #{linear_resblock.1} parent=11 // pred_fallthru
        _
      // Predicated region
      $region25: #{linear_resblock.1} parent=11 // pred_check
        %p185 = pneg %p135
      $region26: #{linear_resblock.1} parent=11 // pred_check_branch
        %187 = sbr.rel (%p185) target = $region28
      $region27: #{linear_resblock.1} parent=11 // pred_region
        _
      $region28: #{linear_resblock.1} parent=11 // pred_fallthru
        _
    $region12: #{linear_resblock.1} parent=5 // pred_fallthru
      _
    %p188 = scmp.lt.s32.totalorder %s11, 2
    // Predicated region
    $region29: #{linear_resblock.1} parent=5 // pred_check
      %p189 = pneg %p188
    $region30: #{linear_resblock.1} parent=5 // pred_check_branch
      %191 = sbr.rel (%p189) target = $region32
    $region31: #{linear_resblock.1} parent=5 // pred_region
      // Predicated region
      $region33: #{linear_resblock.1} parent=31 // pred_check
        %p192 = pneg %p45
      $region34: #{linear_resblock.1} parent=31 // pred_check_branch
        %194 = sbr.rel (%p192) target = $region36
      $region35: #{linear_resblock.1} parent=31 // pred_region
        %p195 = scmp.lt.s32.totalorder %s18, 1
        %s196 = scalar_select %p195, %s18, 1
        %p197 = scmp.lt.s32.totalorder %s19, 0
        %s198 = scalar_select %p197, %s19, 0
        %s199 = sadd.s32 %s198, %s196
        %s200 = smul.addr %s199, 8
        %s201 = scalar_lea.vmem %s0, %s200
      $region36: #{linear_resblock.1} parent=31 // pred_fallthru
        _
    $region32: #{linear_resblock.1} parent=5 // pred_fallthru
      _
    %p202 = scmp.le.s32.totalorder 1, %s11
    %p203 = scmp.lt.s32.totalorder %s11, 3
    %p204 = pnand %p202, %p203
    %p205 = pneg %p204
    // Predicated region
    $region37: #{linear_resblock.1} parent=5 // pred_check
      _
    $region38: #{linear_resblock.1} parent=5 // pred_check_branch
      %207 = sbr.rel (%p204) target = $region40
    $region39: #{linear_resblock.1} parent=5 // pred_region
      %s208 = ssub.s32 %s11, 1
      %p209 = scmp.lt.s32.totalorder %s20, 1
      %s210 = scalar_select %p209, %s20, 1
      %p211 = scmp.lt.s32.totalorder %s21, 0
      %s212 = scalar_select %p211, %s21, 0
      %s213 = sadd.s32 %s212, %s210
      %s214 = smul.addr %s213, 8
      %s215 = scalar_lea.vmem %s0, %s214
      %p216 = pneg %p51
      %p217 = pneg %p48
      %p218 = pneg %p72
      %p219 = pneg %p69
      %p220 = pneg %p93
      %p221 = pneg %p90
      %p222 = pneg %p114
      %p223 = pneg %p111
      %p224 = pneg %p135
      %p225 = pneg %p132
      %p226 = pneg %p161
      %p227 = pneg %p158
      %p228 = scmp.lt.s32.totalorder %s20, 1
      %s229 = scalar_select %p228, %s20, 1
      %s230 = smul.addr %s229, 8
      %s231 = scalar_lea.vmem %s5, %s230
      %p232 = scmp.lt.s32.totalorder %s20, 1
      %s233 = scalar_select %p232, %s20, 1
      %p234 = scmp.lt.s32.totalorder %s21, 0
      %s235 = scalar_select %p234, %s21, 0
      %s236 = sadd.s32 %s235, %s233
      %s237 = smul.addr %s236, 8
      %s238 = scalar_lea.vmem %s0, %s237
      %p239 = scmp.lt.s32.totalorder %s20, 1
      %s240 = scalar_select %p239, %s20, 1
      %s241 = smul.addr %s240, 8
      %s242 = scalar_lea.vmem %s5, %s241
      %p244 = scmp.eq.s32.totalorder %s21, 0
      // Predicated region
      $region41: #{linear_resblock.1} parent=39 // pred_check
        %p245 = pneg %p244
      $region42: #{linear_resblock.1} parent=39 // pred_check_branch
        %247 = sbr.rel (%p245) target = $region44
      $region43: #{linear_resblock.1} parent=39 // pred_region
        %v248 = vld [vmem:[%s2] sm:$0x1]
        %v250 = vlaneseq
        %v251 = vshrl.u32 %v250, 7
        %v252 = vsub.s32 0, %v251
        %v253 = vrot.slane %v248, %v252
        %255 = vst [vmem:[#allocation2] sm:$0xff] %v253
      $region44: #{linear_resblock.1} parent=39 // pred_fallthru
        _
      %v256 = vld [vmem:[%s238] sm:$0xff]
      %v257 = vld [vmem:[#allocation2] sm:$0xff]
      %v258 = vpack.c.bf16 %v256, %v256
      %v259 = vld [vmem:[%s1] sm:$0xf]
      %v260 = vld [vmem:[%s1 + $0x4] sm:$0xf]
      %v261 = vld [vmem:[%s1 + $0x8] sm:$0xf]
      %v262 = vld [vmem:[%s1 + $0xc] sm:$0xf]
      %v263 = vld [vmem:[%s1 + $0x10] sm:$0xf]
      %v264 = vld [vmem:[%s1 + $0x14] sm:$0xf]
      %v265 = vld [vmem:[%s1 + $0x18] sm:$0xf]
      %v266 = vld [vmem:[%s1 + $0x1c] sm:$0xf]
      %v267 = vld [vmem:[%s1 + $0x20] sm:$0xf]
      %v268 = vld [vmem:[%s1 + $0x24] sm:$0xf]
      %v269 = vld [vmem:[%s1 + $0x28] sm:$0xf]
      %v270 = vld [vmem:[%s1 + $0x2c] sm:$0xf]
      %v271 = vld [vmem:[%s1 + $0x30] sm:$0xf]
      %v272 = vld [vmem:[%s1 + $0x34] sm:$0xf]
      %v273 = vld [vmem:[%s1 + $0x38] sm:$0xf]
      %v274 = vld [vmem:[%s1 + $0x3c] sm:$0xf]
      %v291 = vunpack.c.l.b16 %v259
      %v292 = vunpack.c.l.b16 %v260
      %v293 = vunpack.c.l.b16 %v261
      %v294 = vunpack.c.l.b16 %v262
      %v295 = vunpack.c.l.b16 %v263
      %v296 = vunpack.c.l.b16 %v264
      %v297 = vunpack.c.l.b16 %v265
      %v298 = vunpack.c.l.b16 %v266
      %v299 = vunpack.c.l.b16 %v267
      %v300 = vunpack.c.l.b16 %v268
      %v301 = vunpack.c.l.b16 %v269
      %v302 = vunpack.c.l.b16 %v270
      %v303 = vunpack.c.l.b16 %v271
      %v304 = vunpack.c.l.b16 %v272
      %v305 = vunpack.c.l.b16 %v273
      %v306 = vunpack.c.l.b16 %v274
      %v307 = vpack.c.b16 %v292, %v291
      %v308 = vpack.c.b16 %v294, %v293
      %v309 = vpack.c.b16 %v296, %v295
      %v310 = vpack.c.b16 %v298, %v297
      %v311 = vpack.c.b16 %v300, %v299
      %v312 = vpack.c.b16 %v302, %v301
      %v313 = vpack.c.b16 %v304, %v303
      %v314 = vpack.c.b16 %v306, %v305
      %323 = vmatprep.subr.bf16.mxu0 0
      %324 = vmatpush1.bf16.msra.mxu0 %v307
      %325 = vmatprep.subr.bf16.mxu0 0
      %326 = vmatpush1.bf16.msra.mxu0 %v308
      %327 = vmatprep.subr.bf16.mxu0 0
      %328 = vmatpush1.bf16.msra.mxu0 %v309
      %329 = vmatprep.subr.bf16.mxu0 0
      %330 = vmatpush1.bf16.msra.mxu0 %v310
      %331 = vmatprep.subr.bf16.mxu0 0
      %332 = vmatpush1.bf16.msra.mxu0 %v311
      %333 = vmatprep.subr.bf16.mxu0 0
      %334 = vmatpush1.bf16.msra.mxu0 %v312
      %335 = vmatprep.subr.bf16.mxu0 0
      %336 = vmatpush1.bf16.msra.mxu0 %v313
      %337 = vmatprep.subr.bf16.mxu0 0
      %338 = vmatpush1.bf16.msra.mxu0 %v314
      %339 = vmatprep.subr.bf16.mxu0 0
      %340 = vmatpush1.bf16.msra.mxu0 0
      %341 = vmatprep.subr.bf16.mxu0 0
      %342 = vmatpush1.bf16.msra.mxu0 0
      %343 = vmatprep.subr.bf16.mxu0 0
      %344 = vmatpush1.bf16.msra.mxu0 0
      %345 = vmatprep.subr.bf16.mxu0 0
      %346 = vmatpush1.bf16.msra.mxu0 0
      %347 = vmatprep.subr.bf16.mxu0 0
      %348 = vmatpush1.bf16.msra.mxu0 0
      %349 = vmatprep.subr.bf16.mxu0 0
      %350 = vmatpush1.bf16.msra.mxu0 0
      %351 = vmatprep.subr.bf16.mxu0 0
      %352 = vmatpush1.bf16.msra.mxu0 0
      %353 = vmatprep.subr.bf16.mxu0 0
      %354 = vmatpush1.bf16.msra.mxu0 0
      %355 = vmatprep.mubr.bf16.mxu0 0
      %356 = vmatmul.mubr.bf16.gmra.mrb[0].mxu0 %v258
      %v357 = vpop.f32.mrb[0].mxu0
      %v358 = vadd.f32 0.0, %v357
      %v359 = vpop.f32.mrb[0].mxu0
      %v360 = vpop.f32.mrb[0].mxu0
      %v361 = vpop.f32.mrb[0].mxu0
      %362 = vdwg.mxu0
      %v363 = vadd.f32 %v257, %v358
      %364 = vst [vmem:[#allocation2] sm:$0xff] %v363
      // Predicated region
      $region45: #{linear_resblock.1} parent=39 // pred_check
        %p365 = pneg %p244
      $region46: #{linear_resblock.1} parent=39 // pred_check_branch
        %367 = sbr.rel (%p365) target = $region48
      $region47: #{linear_resblock.1} parent=39 // pred_region
        %v368 = vld [vmem:[#allocation2] sm:$0xff]
        %369 = vadd.xlane.f32.xlu0 %v368
        %v370 = vpop.xlane.xlu0 %369
        %v371 = vmul.f32 %v370, 0.03125
        %v372 = vmul.f32 %v368, %v368
        %373 = vadd.xlane.f32.xlu0 %v372
        %v374 = vpop.xlane.xlu0 %373
        %v375 = vmul.f32 %v374, 0.03125
        %v376 = vmul.f32 %v371, %v371
        %v377 = vsub.f32 %v375, %v376
        %v378 = vmax.f32 %v377, 0.0
        %v379 = vsub.f32 %v368, %v371
        %v380 = vadd.f32 %v378, 1e-05
        %v381 = vrsqrt.pop %v380
        %v382 = vmul.f32 %v379, %v381
        %v383 = vld [vmem:[%s3] sm:$0x1]
        %v385 = vlaneseq
        %v386 = vshrl.u32 %v385, 7
        %v387 = vsub.s32 0, %v386
        %v388 = vrot.slane %v383, %v387
        %v390 = vmul.f32 %v382, %v388
        %v391 = vld [vmem:[%s4] sm:$0x1]
        %v393 = vlaneseq
        %v394 = vshrl.u32 %v393, 7
        %v395 = vsub.s32 0, %v394
        %v396 = vrot.slane %v391, %v395
        %v398 = vadd.f32 %v390, %v396
        %v399 = vmax.f32 %v398, 0.0
        %v400 = vadd.f32 %v256, %v399
        %401 = vst [vmem:[%s242] sm:$0xff] %v400
      $region48: #{linear_resblock.1} parent=39 // pred_fallthru
        _
      %p402 = scmp.lt.s32.totalorder %s20, 1
      %s403 = scalar_select %p402, %s20, 1
      %s404 = smul.addr %s403, 8
      %s405 = scalar_lea.vmem %s5, %s404
      // Predicated region
      $region49: #{linear_resblock.1} parent=39 // pred_check
        %p406 = pneg %p158
      $region50: #{linear_resblock.1} parent=39 // pred_check_branch
        %408 = sbr.rel (%p406) target = $region52
      $region51: #{linear_resblock.1} parent=39 // pred_region
        _
      $region52: #{linear_resblock.1} parent=39 // pred_fallthru
        _
    $region40: #{linear_resblock.1} parent=5 // pred_fallthru
      _
    %p409 = scmp.le.s32.totalorder 2, %s11
    // Predicated region
    $region53: #{linear_resblock.1} parent=5 // pred_check
      %p410 = pneg %p409
    $region54: #{linear_resblock.1} parent=5 // pred_check_branch
      %412 = sbr.rel (%p410) target = $region56
    $region55: #{linear_resblock.1} parent=5 // pred_region
      %s413 = ssub.s32 %s11, 2
      // Predicated region
      $region57: #{linear_resblock.1} parent=55 // pred_check
        %p414 = pneg %p164
      $region58: #{linear_resblock.1} parent=55 // pred_check_branch
        %416 = sbr.rel (%p414) target = $region60
      $region59: #{linear_resblock.1} parent=55 // pred_region
        %p417 = scmp.lt.s32.totalorder %s22, 1
        %s418 = scalar_select %p417, %s22, 1
        %s419 = smul.addr %s418, 8
        %s420 = scalar_lea.vmem %s5, %s419
      $region60: #{linear_resblock.1} parent=55 // pred_fallthru
        _
    $region56: #{linear_resblock.1} parent=5 // pred_fallthru
      _
  $region6: #{linear_resblock.1} parent=0 // loop_footer
    %s15 = sadd.s32 1, %s11
  $region7: #{linear_resblock.1} parent=0 // loop_footer_branch
    %10 = sbr.rel target = $region3
  $region8: #{linear_resblock.1} parent=0 // loop_exit
    _

</llo_original>
